<compile_context>
chip_gen: v7x
topology: tpu7x:2x2x1
jax: 0.10.0
libtpu: 0.0.40
codegen_flags: <defaults>
</compile_context>

<pallas_src>
import functools
import math

import jax
import jax.numpy as jnp
from jax import lax
from jax.experimental import pallas as pl
from jax.experimental.pallas import tpu as pltpu


NEG_BIG = -1e30  # finite "-inf": avoids NaN from (-inf) - (-inf)


def _pick_tile(n, preferred):
    """Largest convenient tile <= preferred that divides n (or n itself)."""
    if n <= preferred:
        return n
    for t in (preferred, 128, 64, 32, 16, 8):
        if n % t == 0:
            return t
    return n


# ---------------------------------------------------------------------------
# Kernel 1: fused QKV projection (all heads, one wide matmul)
# ---------------------------------------------------------------------------
def _qkv_kernel(x_ref, wqkv_ref, q_ref, k_ref, v_ref, *, e, scale):
    # x_ref: (tm, C), wqkv_ref: (C, 3E)  ->  q/k/v refs: (tm, E)
    qkv = jnp.dot(x_ref[...], wqkv_ref[...],
                  preferred_element_type=jnp.float32)          # (tm, 3E)
    # fold the 1/sqrt(head_size) softmax scale into Q once (O(tm*E))
    q_ref[...] = (qkv[:, :e] * scale).astype(q_ref.dtype)
    k_ref[...] = qkv[:, e:2 * e].astype(k_ref.dtype)
    v_ref[...] = qkv[:, 2 * e:].astype(v_ref.dtype)


def _qkv_proj(x2d, wqkv, *, e, scale):
    M, C = x2d.shape
    tm = _pick_tile(M, 256)  # fill the MXU M-dim; rows from all batches together
    kernel = functools.partial(_qkv_kernel, e=e, scale=scale)
    return pl.pallas_call(
        kernel,
        out_shape=tuple(jax.ShapeDtypeStruct((M, e), x2d.dtype) for _ in range(3)),
        grid_spec=pltpu.PrefetchScalarGridSpec(
            num_scalar_prefetch=0,
            grid=(M // tm,),
            in_specs=[
                pl.BlockSpec((tm, C), lambda i: (i, 0)),
                pl.BlockSpec((C, 3 * e), lambda i: (0, 0)),
            ],
            out_specs=[pl.BlockSpec((tm, e), lambda i: (i, 0)) for _ in range(3)],
        ),
        compiler_params=pltpu.CompilerParams(
            dimension_semantics=("parallel",)),
    )(x2d, wqkv)


# ---------------------------------------------------------------------------
# Kernel 2: flash-style causal attention over all heads + fused output proj
# ---------------------------------------------------------------------------
def _mha_attn_kernel(q_ref, k_ref, v_ref, wp_ref, bp_ref, o_ref,
                     m_sc, l_sc, acc_sc, *, nh, hs, tq, tkv):
    qi = pl.program_id(1)
    ki = pl.program_id(2)
    nkv = pl.num_programs(2)

    @pl.when(ki == 0)
    def _init():
        m_sc[...] = jnp.full_like(m_sc, NEG_BIG)
        l_sc[...] = jnp.zeros_like(l_sc)
        acc_sc[...] = jnp.zeros_like(acc_sc)

    # Skip KV tiles lying entirely above the causal diagonal (~2x less work).
    @pl.when(ki * tkv <= qi * tq + (tq - 1))
    def _compute():
        q = q_ref[0]                       # (tq,  nh*hs)  (already 1/sqrt(hs)-scaled)
        k = k_ref[0]                       # (tkv, nh*hs)
        v = v_ref[0]                       # (tkv, nh*hs)
        row = qi * tq + lax.broadcasted_iota(jnp.int32, (tq, tkv), 0)
        col = ki * tkv + lax.broadcasted_iota(jnp.int32, (tq, tkv), 1)
        causal = col <= row                # per-tile mask, O(tq*tkv)

        for h in range(nh):                # nh is small & static -> unrolled
            sl = slice(h * hs, (h + 1) * hs)
            # scores: contract on the feature dim (no explicit k.T relayout)
            s = lax.dot_general(q[:, sl], k[:, sl], (((1,), (1,)), ((), ())),
                                preferred_element_type=jnp.float32)   # (tq, tkv)
            s = jnp.where(causal, s, NEG_BIG)

            m_prev = m_sc[h]                                          # (tq, 1)
            m_new = jnp.maximum(m_prev, jnp.max(s, axis=-1, keepdims=True))
            alpha = jnp.exp(m_prev - m_new)
            p = jnp.exp(s - m_new)                                    # (tq, tkv)
            l_sc[h] = alpha * l_sc[h] + jnp.sum(p, axis=-1, keepdims=True)
            acc_sc[h] = alpha * acc_sc[h] + jnp.dot(
                p.astype(v.dtype), v[:, sl],
                preferred_element_type=jnp.float32)                   # (tq, hs)
            m_sc[h] = m_new

    @pl.when(ki == nkv - 1)
    def _epilogue():
        # Normalize once at the end (flash formulation: no per-step divide),
        # concatenate heads lane-dense, then fuse the output projection + bias.
        att = jnp.concatenate(
            [acc_sc[h] * pl.reciprocal(l_sc[h], approx=False) for h in range(nh)],
            axis=-1).astype(wp_ref.dtype)                             # (tq, nh*hs)
        out = jnp.dot(att, wp_ref[...], preferred_element_type=jnp.float32)
        o_ref[0] = (out + bp_ref[...]).astype(o_ref.dtype)
        # TODO(synk): training-mode dropout (attention weights + proj output).


def _flash_mha(q, k, v, wp, bp, *, nh, hs, q_tile=None, kv_tile=None):
    B, T, E = q.shape
    C = wp.shape[1]
    tq = q_tile or _pick_tile(T, 128)
    tkv = kv_tile or _pick_tile(T, 128)
    assert T % tq == 0 and T % tkv == 0
    nq, nkv = T // tq, T // tkv

    def kv_index(b, qi, ki):
        # Clamp fully-masked (skipped) steps to the last useful KV block so the
        # pipeline re-uses the resident block instead of issuing a wasted DMA.
        return (b, jnp.minimum(ki, (qi * tq + tq - 1) // tkv), 0)

    kernel = functools.partial(_mha_attn_kernel, nh=nh, hs=hs, tq=tq, tkv=tkv)
    return pl.pallas_call(
        kernel,
        out_shape=jax.ShapeDtypeStruct((B, T, C), q.dtype),
        grid_spec=pltpu.PrefetchScalarGridSpec(
            num_scalar_prefetch=0,
            grid=(B, nq, nkv),
            in_specs=[
                pl.BlockSpec((1, tq, E), lambda b, qi, ki: (b, qi, 0)),
                pl.BlockSpec((1, tkv, E), kv_index),
                pl.BlockSpec((1, tkv, E), kv_index),
                pl.BlockSpec((E, C), lambda b, qi, ki: (0, 0)),
                pl.BlockSpec((1, C), lambda b, qi, ki: (0, 0)),
            ],
            out_specs=pl.BlockSpec((1, tq, C), lambda b, qi, ki: (b, qi, 0)),
            scratch_shapes=[
                pltpu.VMEM((nh, tq, 1), jnp.float32),    # running max  m
                pltpu.VMEM((nh, tq, 1), jnp.float32),    # running sum  l
                pltpu.VMEM((nh, tq, hs), jnp.float32),   # running acc
            ],
        ),
        compiler_params=pltpu.CompilerParams(
            # batch & q-tile axes parallel (megacore); KV reduction last.
            dimension_semantics=("parallel", "parallel", "arbitrary")),
    )(q, k, v, wp, bp)


# ---------------------------------------------------------------------------
# Wrapper mirroring MultiHeadAttention.forward (eval mode)
# ---------------------------------------------------------------------------
def _merge_heads(w):  # (nh, C, hs) -> (C, nh*hs)
    nh, C, hs = w.shape
    return jnp.transpose(w, (1, 0, 2)).reshape(C, nh * hs)


def mha_forward(x, wq, wk, wv, wp, bp, *, q_tile=None, kv_tile=None):
    """x: (B,T,C); wq/wk/wv: (nh,C,hs); wp: (nh*hs, C); bp: (C,). Returns (B,T,C)."""
    B, T, C = x.shape
    nh, _, hs = wq.shape
    E = nh * hs
    assert wp.shape == (E, C) and bp.shape == (C,)

    # Fused QKV weight (C, 3E): [all heads' Q | all heads' K | all heads' V]
    wqkv = jnp.concatenate([_merge_heads(wq), _merge_heads(wk), _merge_heads(wv)],
                           axis=1)
    q2d, k2d, v2d = _qkv_proj(x.reshape(B * T, C), wqkv,
                              e=E, scale=1.0 / math.sqrt(hs))
    q = q2d.reshape(B, T, E)
    k = k2d.reshape(B, T, E)
    v = v2d.reshape(B, T, E)
    return _flash_mha(q, k, v, wp, bp.reshape(1, C), nh=nh, hs=hs,
                      q_tile=q_tile, kv_tile=kv_tile)


def mha_reference(x, wq, wk, wv, wp, bp):
    """Pure-JAX reference mirroring the PyTorch MultiHeadAttention (eval mode)."""
    B, T, C = x.shape
    nh, _, hs = wq.shape
    outs = []
    mask = jnp.tril(jnp.ones((T, T), dtype=bool))
    for h in range(nh):
        q = x @ wq[h]
        k = x @ wk[h]
        v = x @ wv[h]
        wei = (q @ jnp.swapaxes(k, 2, 1)) / math.sqrt(hs)
        wei = jnp.where(mask[None, :, :], wei, -jnp.inf)
        wei = jax.nn.softmax(wei, axis=2)
        outs.append(wei @ v)
    cat = jnp.concatenate(outs, axis=-1)
    return cat @ wp + bp


if __name__ == "__main__":
    # Small shapes consistent with the module:
    # batch=2, seq (block_size)=8, embed_size=32, num_head=2, head_size=16.
    B, T, C = 2, 8, 32
    num_head, head_size = 2, 16
    E = num_head * head_size
    assert E == C  # proj = Linear(embed_size, embed_size) expects concat == embed

    key = jax.random.PRNGKey(0)
    kx, kq, kk, kv, kp, kb = jax.random.split(key, 6)
    x = jax.random.normal(kx, (B, T, C), dtype=jnp.float32)

    # nn.Linear(embed, head).weight is (hs, C); store transposed as (C, hs).
    s_in = 1.0 / math.sqrt(C)
    wq = jax.random.uniform(kq, (num_head, C, head_size), minval=-s_in, maxval=s_in,
                            dtype=jnp.float32)
    wk = jax.random.uniform(kk, (num_head, C, head_size), minval=-s_in, maxval=s_in,
                            dtype=jnp.float32)
    wv = jax.random.uniform(kv, (num_head, C, head_size), minval=-s_in, maxval=s_in,
                            dtype=jnp.float32)
    s_pr = 1.0 / math.sqrt(E)
    wp = jax.random.uniform(kp, (E, C), minval=-s_pr, maxval=s_pr, dtype=jnp.float32)
    bp = jax.random.uniform(kb, (C,), minval=-s_pr, maxval=s_pr, dtype=jnp.float32)

    out = mha_forward(x, wq, wk, wv, wp, bp)
    out = jax.block_until_ready(out)

    ref = mha_reference(x, wq, wk, wv, wp, bp)
    assert out.shape == (B, T, C)
    assert jnp.allclose(out, ref, atol=1e-4, rtol=1e-4), "mismatch vs reference"

    print("KERNEL_OK")
</pallas_src>

<mosaic_0001>
module attributes {stable_mosaic.version = 11 : i64} {
  func.func @_qkv_kernel(%arg0: i32, %arg1: memref<16x32xf32, #tpu.memory_space<vmem>>, %arg2: memref<32x96xf32, #tpu.memory_space<vmem>>, %arg3: memref<16x32xf32, #tpu.memory_space<vmem>>, %arg4: memref<16x32xf32, #tpu.memory_space<vmem>>, %arg5: memref<16x32xf32, #tpu.memory_space<vmem>>) attributes {dimension_semantics = [#tpu.dimension_semantics<parallel>], iteration_bounds = array<i64: 1>, scalar_prefetch = 0 : i64, scratch_operands = 0 : i64, tpu.core_type = #tpu.core_type<tc>, window_params = [{transform_indices = @transform_0, window_bounds = array<i64: 16, 32>}, {pipeline_mode = #tpu.pipeline_mode<synchronous>, transform_indices = @transform_1, window_bounds = array<i64: 32, 96>}, {transform_indices = @transform_2, window_bounds = array<i64: 16, 32>}, {transform_indices = @transform_3, window_bounds = array<i64: 16, 32>}, {transform_indices = @transform_4, window_bounds = array<i64: 16, 32>}]} {
    %c0 = arith.constant 0 : index
    %c0_0 = arith.constant 0 : index
    %0 = vector.load %arg1[%c0, %c0_0] : memref<16x32xf32, #tpu.memory_space<vmem>>, vector<16x32xf32>
    %c0_1 = arith.constant 0 : index
    %c0_2 = arith.constant 0 : index
    %1 = vector.load %arg2[%c0_1, %c0_2] : memref<32x96xf32, #tpu.memory_space<vmem>>, vector<32x96xf32>
    %cst = arith.constant dense<0.000000e+00> : vector<16x96xf32>
    %2 = tpu.matmul %0, %1, %cst {dimension_numbers = #tpu.dot_dimension_numbers<[1], [0], [0], [1], [0, 0, 1, 1], [], []>} : vector<16x32xf32>, vector<32x96xf32>, vector<16x96xf32> -> vector<16x96xf32>
    %3 = vector.extract_strided_slice %2 {offsets = [0, 0], sizes = [16, 32], strides = [1, 1]} : vector<16x96xf32> to vector<16x32xf32>
    %cst_3 = arith.constant 2.500000e-01 : f32
    %4 = vector.broadcast %cst_3 : f32 to vector<16x32xf32>
    %5 = arith.mulf %3, %4 : vector<16x32xf32>
    %c0_4 = arith.constant 0 : index
    %c0_5 = arith.constant 0 : index
    %6 = vector.load %arg3[%c0_4, %c0_5] : memref<16x32xf32, #tpu.memory_space<vmem>>, vector<16x32xf32>
    tpu.vector_store %arg3[%c0_4, %c0_5], %5 {strides = array<i32>} : memref<16x32xf32, #tpu.memory_space<vmem>>, vector<16x32xf32>,
    %7 = vector.extract_strided_slice %2 {offsets = [0, 32], sizes = [16, 32], strides = [1, 1]} : vector<16x96xf32> to vector<16x32xf32>
    %c0_6 = arith.constant 0 : index
    %c0_7 = arith.constant 0 : index
    %8 = vector.load %arg4[%c0_6, %c0_7] : memref<16x32xf32, #tpu.memory_space<vmem>>, vector<16x32xf32>
    tpu.vector_store %arg4[%c0_6, %c0_7], %7 {strides = array<i32>} : memref<16x32xf32, #tpu.memory_space<vmem>>, vector<16x32xf32>,
    %9 = vector.extract_strided_slice %2 {offsets = [0, 64], sizes = [16, 32], strides = [1, 1]} : vector<16x96xf32> to vector<16x32xf32>
    %c0_8 = arith.constant 0 : index
    %c0_9 = arith.constant 0 : index
    %10 = vector.load %arg5[%c0_8, %c0_9] : memref<16x32xf32, #tpu.memory_space<vmem>>, vector<16x32xf32>
    tpu.vector_store %arg5[%c0_8, %c0_9], %9 {strides = array<i32>} : memref<16x32xf32, #tpu.memory_space<vmem>>, vector<16x32xf32>,
    return
  }
  func.func @transform_0(%arg0: i32) -> (i32, i32) {
    %c0_i32 = arith.constant 0 : i32
    %c0_i32_0 = arith.constant 0 : i32
    return %arg0, %c0_i32 : i32, i32
  }
  func.func @transform_1(%arg0: i32) -> (i32, i32) {
    %c0_i32 = arith.constant 0 : i32
    %c0_i32_0 = arith.constant 0 : i32
    %c0_i32_1 = arith.constant 0 : i32
    return %c0_i32, %c0_i32_0 : i32, i32
  }
  func.func @transform_2(%arg0: i32) -> (i32, i32) {
    %c0_i32 = arith.constant 0 : i32
    %c0_i32_0 = arith.constant 0 : i32
    return %arg0, %c0_i32 : i32, i32
  }
  func.func @transform_3(%arg0: i32) -> (i32, i32) {
    %c0_i32 = arith.constant 0 : i32
    %c0_i32_0 = arith.constant 0 : i32
    return %arg0, %c0_i32 : i32, i32
  }
  func.func @transform_4(%arg0: i32) -> (i32, i32) {
    %c0_i32 = arith.constant 0 : i32
    %c0_i32_0 = arith.constant 0 : i32
    return %arg0, %c0_i32 : i32, i32
  }
}

</mosaic_0001>

<llo_original>
// kernel: tpu_custom_call.1
$region0: #{tpu_custom_call.1}
  #allocation0 [shape = 'u32[]', space=smem, size = 0x4, offset = 0x4, fixed_abs, tag = 'smem constant byte address 0x4 - core index']
  #allocation1 [shape = 'u32[144,128]{1,0:T(1,128)}', space=vmem, size = 0x12000, scoped, tag = 'internal scratch']
  %s0 = inlined_call_operand.hbm [shape: f32[16,32], index: 0, kind: input, shape index: {}]
  %s1 = inlined_call_operand.hbm [shape: f32[32,96], index: 1, kind: input, shape index: {}]
  %s2 = inlined_call_operand.hbm [shape: f32[16,32], index: 2, kind: output, shape index: {0}]
  %s3 = inlined_call_operand.hbm [shape: f32[16,32], index: 3, kind: output, shape index: {1}]
  %s4 = inlined_call_operand.hbm [shape: f32[16,32], index: 4, kind: output, shape index: {2}]
  %5 = xla_tuple %s2, %s3, %s4
  %s6 = sld [smem:[#allocation0]]
  $region42: #{tpu_custom_call.1} parent=0
    _
  %s8 = ssub.s32 1, %s6
  %s9 = scalar_select 0, %s8, %s6
  $region1: #{tpu_custom_call.1} parent=0
    #allocation2 [shape = 'u8[8192]{0}', space=vmem, size = 0x2000, scoped, tag = 'input window, operand 0, single buffered']
    #allocation3 [shape = 's32[1]{0}', space=sflag, size = 0x4, scoped, tag = 'scoped memory for tpu_custom_call.1']
    #allocation4 [shape = 's32[1]{0}', space=sflag, size = 0x4, scoped, tag = 'scoped memory for tpu_custom_call.1']
    #allocation5 [shape = 'u8[16384]{0}', space=vmem, size = 0x4000, scoped, tag = 'input window, operand 1, single buffered']
    #allocation6 [shape = 's32[1]{0}', space=sflag, size = 0x4, scoped, tag = 'scoped memory for tpu_custom_call.1']
    #allocation7 [shape = 'u8[8192]{0}', space=vmem, size = 0x2000, scoped, tag = 'output window, operand 0, single buffered']
    #allocation8 [shape = 'u8[8192]{0}', space=vmem, size = 0x2000, scoped, tag = 'output window, operand 1, single buffered']
    #allocation9 [shape = 's32[1]{0}', space=sflag, size = 0x4, scoped, tag = 'scoped memory for tpu_custom_call.1']
    #allocation10 [shape = 'u8[8192]{0}', space=vmem, size = 0x2000, scoped, tag = 'output window, operand 2, single buffered']
    %10 = vsyncpa [#allocation3], 0
    %11 = vsyncpa [#allocation6], 0
    %12 = vsyncpa [#allocation4], 0
    %13 = vsyncpa [#allocation9], 0
    // Predicated region
    $region2: #{tpu_custom_call.1} parent=1 // pred_check
      _
    $region3: #{tpu_custom_call.1} parent=1 // pred_check_branch
      %15 = sbr.rel (0) target = $region5
    $region4: #{tpu_custom_call.1} parent=1 // pred_region
      %s17 = ssub.s32 256, 256
      %18 = vsyncadd [#allocation3], %s17
      %s19 = sshll.u32 [#allocation2], 4
      %s20 = int_to_ptr.vmem [resolvable:$true] %s19
      %25 = dma.hbm_to_vmem [thread:$0]  %s0, 256, %s20, [#allocation3], 128, 128, 8
    $region5: #{tpu_custom_call.1} parent=1 // pred_fallthru
      _
    // Predicated region
    $region6: #{tpu_custom_call.1} parent=1 // pred_check
      _
    $region7: #{tpu_custom_call.1} parent=1 // pred_check_branch
      %27 = sbr.rel (0) target = $region9
    $region8: #{tpu_custom_call.1} parent=1 // pred_region
      %s29 = ssub.s32 512, 512
      %30 = vsyncadd [#allocation6], %s29
      %s31 = sshll.u32 [#allocation5], 4
      %s32 = int_to_ptr.vmem [resolvable:$true] %s31
      %37 = dma.hbm_to_vmem [thread:$0]  %s1, 512, %s32, [#allocation6], 128, 128, 8
    $region9: #{tpu_custom_call.1} parent=1 // pred_fallthru
      _
    // Predicated region
    $region10: #{tpu_custom_call.1} parent=1 // pred_check
      _
    $region11: #{tpu_custom_call.1} parent=1 // pred_check_branch
      %39 = sbr.rel (0) target = $region13
    $region12: #{tpu_custom_call.1} parent=1 // pred_region
      %40 = dma.done [#allocation3], 256
    $region13: #{tpu_custom_call.1} parent=1 // pred_fallthru
      _
    // Predicated region
    $region14: #{tpu_custom_call.1} parent=1 // pred_check
      _
    $region15: #{tpu_custom_call.1} parent=1 // pred_check_branch
      %42 = sbr.rel (0) target = $region17
    $region16: #{tpu_custom_call.1} parent=1 // pred_region
      %43 = dma.done [#allocation6], 512
    $region17: #{tpu_custom_call.1} parent=1 // pred_fallthru
      _
    %v44 = vld [vmem:[#allocation2] sm:$0xff]
    %v45 = vld [vmem:[#allocation2 + $0x8] sm:$0xff]
    %v46 = vld [vmem:[#allocation5] sm:$0xff]
    %v47 = vld [vmem:[#allocation5 + $0x8] sm:$0xff]
    %v48 = vld [vmem:[#allocation5 + $0x10] sm:$0xff]
    %v49 = vld [vmem:[#allocation5 + $0x18] sm:$0xff]
    %vm50 = vcmask 261120
    %v52 = vsel %vm50, %v44, 0
    %v55 = vsel %vm50, %v45, 0
    %57 = vmatprep.subr.mxu0 0.0
    %58 = vmatpush1.msra.mxu0 %v46
    %59 = vmatprep.subr.mxu0 0.0
    %60 = vmatpush1.msra.mxu0 %v47
    %61 = vmatprep.subr.mxu0 0.0
    %62 = vmatpush1.msra.mxu0 %v48
    %63 = vmatprep.subr.mxu0 0.0
    %64 = vmatpush1.msra.mxu0 %v49
    %65 = vmatprep.subr.mxu0 0.0
    %66 = vmatpush1.msra.mxu0 0.0
    %67 = vmatprep.subr.mxu0 0.0
    %68 = vmatpush1.msra.mxu0 0.0
    %69 = vmatprep.subr.mxu0 0.0
    %70 = vmatpush1.msra.mxu0 0.0
    %71 = vmatprep.subr.mxu0 0.0
    %72 = vmatpush1.msra.mxu0 0.0
    %73 = vmatprep.subr.mxu0 0.0
    %74 = vmatpush1.msra.mxu0 0.0
    %75 = vmatprep.subr.mxu0 0.0
    %76 = vmatpush1.msra.mxu0 0.0
    %77 = vmatprep.subr.mxu0 0.0
    %78 = vmatpush1.msra.mxu0 0.0
    %79 = vmatprep.subr.mxu0 0.0
    %80 = vmatpush1.msra.mxu0 0.0
    %81 = vmatprep.subr.mxu0 0.0
    %82 = vmatpush1.msra.mxu0 0.0
    %83 = vmatprep.subr.mxu0 0.0
    %84 = vmatpush1.msra.mxu0 0.0
    %85 = vmatprep.subr.mxu0 0.0
    %86 = vmatpush1.msra.mxu0 0.0
    %87 = vmatprep.subr.mxu0 0.0
    %88 = vmatpush1.msra.mxu0 0.0
    %89 = vmatprep.subr.mxu0 0.0
    %90 = vmatpush1.msra.mxu0 0.0
    %91 = vmatprep.subr.mxu0 0.0
    %92 = vmatpush1.msra.mxu0 0.0
    %93 = vmatprep.subr.mxu0 0.0
    %94 = vmatpush1.msra.mxu0 0.0
    %95 = vmatprep.subr.mxu0 0.0
    %96 = vmatpush1.msra.mxu0 0.0
    %97 = vmatprep.subr.mxu0 0.0
    %98 = vmatpush1.msra.mxu0 0.0
    %99 = vmatprep.subr.mxu0 0.0
    %100 = vmatpush1.msra.mxu0 0.0
    %101 = vmatprep.subr.mxu0 0.0
    %102 = vmatpush1.msra.mxu0 0.0
    %103 = vmatprep.subr.mxu0 0.0
    %104 = vmatpush1.msra.mxu0 0.0
    %105 = vmatprep.subr.mxu0 0.0
    %106 = vmatpush1.msra.mxu0 0.0
    %107 = vmatprep.subr.mxu0 0.0
    %108 = vmatpush1.msra.mxu0 0.0
    %109 = vmatprep.subr.mxu0 0.0
    %110 = vmatpush1.msra.mxu0 0.0
    %111 = vmatprep.subr.mxu0 0.0
    %112 = vmatpush1.msra.mxu0 0.0
    %113 = vmatprep.subr.mxu0 0.0
    %114 = vmatpush1.msra.mxu0 0.0
    %115 = vmatprep.subr.mxu0 0.0
    %116 = vmatpush1.msra.mxu0 0.0
    %117 = vmatprep.subr.mxu0 0.0
    %118 = vmatpush1.msra.mxu0 0.0
    %119 = vmatprep.subr.mxu0 0.0
    %120 = vmatpush1.msra.mxu0 0.0
    %121 = vmatprep.mubr.f32.mxu0 0.0
    %122 = vmatmul.mubr.f32.gmra.mrb[0].mxu0 %v52
    %v123 = vpop.f32.mrb[0].mxu0
    %v124 = vadd.f32 0.0, %v123
    %v125 = vpop.f32.mrb[0].mxu0
    %126 = vmatprep.mubr.f32.mxu0 0.0
    %127 = vmatmul.mubr.f32.gmra.mrb[0].mxu0 %v55
    %v128 = vpop.f32.mrb[0].mxu0
    %v129 = vadd.f32 0.0, %v128
    %v130 = vpop.f32.mrb[0].mxu0
    %131 = vdwg.mxu0
    %v132 = vmul.f32 %v124, 0.25
    %v133 = vmul.f32 %v129, 0.25
    %134 = vst.msk [vmem:[#allocation7] sm:$0xff] %vm50, %v132
    %135 = vst.msk [vmem:[#allocation7 + $0x8] sm:$0xff] %vm50, %v133
    %138 = vrot.lane.b32.xlu0 %v124, 96
    %v139 = vpop.permute.xlu0 %138
    %140 = vrot.lane.b32.xlu0 %v129, 96
    %v141 = vpop.permute.xlu0 %140
    %144 = vst.msk [vmem:[#allocation8] sm:$0xff] %vm50, %v139
    %145 = vst.msk [vmem:[#allocation8 + $0x8] sm:$0xff] %vm50, %v141
    %146 = vrot.lane.b32.xlu0 %v124, 64
    %v147 = vpop.permute.xlu0 %146
    %148 = vrot.lane.b32.xlu0 %v129, 64
    %v149 = vpop.permute.xlu0 %148
    %152 = vst.msk [vmem:[#allocation10] sm:$0xff] %vm50, %v147
    %153 = vst.msk [vmem:[#allocation10 + $0x8] sm:$0xff] %vm50, %v149
    // Predicated region
    $region18: #{tpu_custom_call.1} parent=1 // pred_check
      _
    $region19: #{tpu_custom_call.1} parent=1 // pred_check_branch
      %155 = sbr.rel (0) target = $region21
    $region20: #{tpu_custom_call.1} parent=1 // pred_region
      %s157 = ssub.s32 256, 256
      %158 = vsyncadd [#allocation4], %s157
      %s159 = sshll.u32 [#allocation7], 4
      %s160 = int_to_ptr.vmem [resolvable:$true] %s159
      %165 = dma.vmem_to_hbm [thread:$0]  %s160, 256, %s2, [#allocation4], 128, 128, 8
    $region21: #{tpu_custom_call.1} parent=1 // pred_fallthru
      _
    // Predicated region
    $region22: #{tpu_custom_call.1} parent=1 // pred_check
      _
    $region23: #{tpu_custom_call.1} parent=1 // pred_check_branch
      %167 = sbr.rel (0) target = $region25
    $region24: #{tpu_custom_call.1} parent=1 // pred_region
      %s169 = ssub.s32 256, 256
      %170 = vsyncadd [#allocation9], %s169
      %s171 = sshll.u32 [#allocation8], 4
      %s172 = int_to_ptr.vmem [resolvable:$true] %s171
      %177 = dma.vmem_to_hbm [thread:$0]  %s172, 256, %s3, [#allocation9], 128, 128, 8
    $region25: #{tpu_custom_call.1} parent=1 // pred_fallthru
      _
    // Predicated region
    $region26: #{tpu_custom_call.1} parent=1 // pred_check
      _
    $region27: #{tpu_custom_call.1} parent=1 // pred_check_branch
      %179 = sbr.rel (0) target = $region29
    $region28: #{tpu_custom_call.1} parent=1 // pred_region
      %s181 = ssub.s32 256, 256
      %182 = vsyncadd [#allocation9], %s181
      %s183 = sshll.u32 [#allocation10], 4
      %s184 = int_to_ptr.vmem [resolvable:$true] %s183
      %189 = dma.vmem_to_hbm [thread:$0]  %s184, 256, %s4, [#allocation9], 128, 128, 8
    $region29: #{tpu_custom_call.1} parent=1 // pred_fallthru
      _
    // Predicated region
    $region30: #{tpu_custom_call.1} parent=1 // pred_check
      _
    $region31: #{tpu_custom_call.1} parent=1 // pred_check_branch
      %191 = sbr.rel (0) target = $region33
    $region32: #{tpu_custom_call.1} parent=1 // pred_region
      %192 = dma.done [#allocation4], 256
    $region33: #{tpu_custom_call.1} parent=1 // pred_fallthru
      _
    // Predicated region
    $region34: #{tpu_custom_call.1} parent=1 // pred_check
      _
    $region35: #{tpu_custom_call.1} parent=1 // pred_check_branch
      %194 = sbr.rel (0) target = $region37
    $region36: #{tpu_custom_call.1} parent=1 // pred_region
      %195 = dma.done [#allocation9], 256
    $region37: #{tpu_custom_call.1} parent=1 // pred_fallthru
      _
    // Predicated region
    $region38: #{tpu_custom_call.1} parent=1 // pred_check
      _
    $region39: #{tpu_custom_call.1} parent=1 // pred_check_branch
      %197 = sbr.rel (0) target = $region41
    $region40: #{tpu_custom_call.1} parent=1 // pred_region
      %198 = dma.done [#allocation9], 256
    $region41: #{tpu_custom_call.1} parent=1 // pred_fallthru
      _
    %199 = vsyncpa [#allocation3], 1
    %200 = vsyncpa [#allocation6], 1
    %201 = vsyncpa [#allocation4], 1
    %202 = vsyncpa [#allocation9], 1

</llo_original>
